<compile_context>
chip_gen: v5e
topology: v5e:2x2
jax: 0.10.0
libtpu: 0.0.40
codegen_flags: <defaults>
</compile_context>

<pallas_src>
import functools

import numpy as np
import jax
import jax.numpy as jnp
from jax.experimental import pallas as pl
from jax.experimental.pallas import tpu as pltpu


def _round_up(x, m):
    return ((x + m - 1) // m) * m


def _cdiv(a, b):
    return -(-a // b)


# ----------------------------------------------------------------------------
# Pallas kernel: PiononoHead forward (1x1 conv stack + ReLU + channel softmax)
#
# Per grid step (one batch element b = program_id(0), one spatial tile):
#   x_ref : (F, T)      feature pixels (NCHW, flattened spatially), f32 or bf16
#   b1_ref: (B, F, 1)   f32   resident per-batch effective bias  W1_z @ z[b] + b1
#   w1_ref: (F, F)      bf16  layer-1 weight (feature part), (out, in)
#   w2_ref: (F, F)      bf16
#   b2_ref: (F, 1)      f32
#   w3_ref: (C, F)      bf16
#   b3_ref: (C, 1)      f32
#   o_ref : (C, T)      bf16  per-pixel class probabilities (softmax over sublanes)
# ----------------------------------------------------------------------------
def pionono_head_kernel(x_ref, b1_ref, w1_ref, w2_ref, b2_ref, w3_ref, b3_ref,
                        o_ref, *, use_softmax):
    b = pl.program_id(0)

    x = x_ref[...].astype(jnp.bfloat16)                      # (F, T) bf16 MXU operand
    b1 = b1_ref[b]                                           # (F, 1) f32 per-batch bias

    # concat([feat, z]) @ W1  ==  W1_f @ feat + (W1_z @ z + b1)   (precomputed bias)
    h = jnp.dot(w1_ref[...], x, preferred_element_type=jnp.float32) + b1
    h = jnp.maximum(h, 0.0)                                  # ReLU (f32, VPU)

    h = jnp.dot(w2_ref[...], h.astype(jnp.bfloat16),
                preferred_element_type=jnp.float32) + b2_ref[...]
    h = jnp.maximum(h, 0.0)                                  # ReLU

    y = jnp.dot(w3_ref[...], h.astype(jnp.bfloat16),
                preferred_element_type=jnp.float32) + b3_ref[...]

    if use_softmax:
        # Softmax over the class axis (sublanes) == torch.nn.Softmax(dim=1).
        m = jnp.max(y, axis=0, keepdims=True)
        e = jnp.exp(y - m)
        y = e / jnp.sum(e, axis=0, keepdims=True)            # exact reciprocal

    o_ref[...] = y.astype(o_ref.dtype)


def pionono_head_forward(feat_nchw, b1_eff, w1f, w2, b2, w3, b3,
                         *, use_softmax=True, tile_hw=None,
                         out_dtype=jnp.bfloat16):
    """feat_nchw: (B, F, H, W) f32/bf16; b1_eff: (B, F) f32 -> (B, C, H, W)."""
    B, F, H, W = feat_nchw.shape
    C = w3.shape[0]
    HW = H * W

    # Pick a lane-dense spatial tile (multiple of 128, up to 16384 pixels).
    MAX_TILE_HW = 16384
    if tile_hw is None:
        hw128 = _round_up(HW, 128)
        n_tiles = max(1, _cdiv(hw128, MAX_TILE_HW))
        tile_hw = _round_up(_cdiv(hw128, n_tiles), 128)
        n_tiles = _cdiv(HW, tile_hw)
        # v7x megacore: both grid axes are "parallel"; prefer an even total grid
        # so both TensorCores get work when the batch alone can't provide it.
        if (B * n_tiles) % 2 == 1 and hw128 >= 2 * 128:
            tile_hw = _round_up(_cdiv(hw128, n_tiles + 1), 128)
            n_tiles = _cdiv(HW, tile_hw)
    else:
        assert tile_hw % 128 == 0, "tile_hw must be a multiple of 128"
        n_tiles = _cdiv(HW, tile_hw)

    # Flatten spatially (contiguous trailing dims: no copy).  No dtype cast and
    # no padding here -- the cast happens in-kernel and the ragged tail is
    # handled by Pallas partial-block masking.
    x = feat_nchw.reshape(B, F, HW)

    b1c = b1_eff.astype(jnp.float32)[:, :, None]             # (B, F, 1)
    b2c = b2.astype(jnp.float32).reshape(F, 1)
    b3c = b3.astype(jnp.float32).reshape(C, 1)

    in_bytes = jnp.dtype(x.dtype).itemsize
    out_bytes = jnp.dtype(out_dtype).itemsize
    cost = pl.CostEstimate(
        flops=2 * B * HW * (F * F + F * F + C * F),
        transcendentals=(B * HW * C) if use_softmax else 0,
        bytes_accessed=(B * HW * (F * in_bytes + C * out_bytes)
                        + (2 * F * F + C * F) * 2          # bf16 weights
                        + (B * F + F + C) * 4),            # f32 biases
    )

    kernel = functools.partial(pionono_head_kernel, use_softmax=use_softmax)
    out = pl.pallas_call(
        kernel,
        out_shape=jax.ShapeDtypeStruct((B, C, HW), out_dtype),
        grid_spec=pltpu.PrefetchScalarGridSpec(
            num_scalar_prefetch=0,
            grid=(B, n_tiles),
            in_specs=[
                pl.BlockSpec((None, F, tile_hw), lambda b, t: (b, 0, t)),
                pl.BlockSpec((B, F, 1), lambda b, t: (0, 0, 0)),   # resident
                pl.BlockSpec((F, F), lambda b, t: (0, 0)),
                pl.BlockSpec((F, F), lambda b, t: (0, 0)),
                pl.BlockSpec((F, 1), lambda b, t: (0, 0)),
                pl.BlockSpec((C, F), lambda b, t: (0, 0)),
                pl.BlockSpec((C, 1), lambda b, t: (0, 0)),
            ],
            out_specs=pl.BlockSpec((None, C, tile_hw), lambda b, t: (b, 0, t)),
        ),
        compiler_params=pltpu.CompilerParams(
            dimension_semantics=("parallel", "parallel"),
            vmem_limit_bytes=32 * 1024 * 1024),
        cost_estimate=cost,
    )(x, b1c,
      w1f.astype(jnp.bfloat16), w2.astype(jnp.bfloat16), b2c,
      w3.astype(jnp.bfloat16), b3c)

    return out.reshape(B, C, H, W)


# ----------------------------------------------------------------------------
# Parameter construction (mirrors the PyTorch __init__ shapes)
# ----------------------------------------------------------------------------
def _xavier(key, out_dim, in_dim):
    bound = float(np.sqrt(6.0 / (in_dim + out_dim)))
    return jax.random.uniform(key, (out_dim, in_dim), jnp.float32, -bound, bound)


def init_pionono_params(key, *, num_annotators, latent_dim, num_filters,
                        num_classes, z_prior_mu, z_prior_sigma,
                        z_posterior_init_sigma, head_dtype=jnp.bfloat16):
    k1, k2, k3, k4 = jax.random.split(key, 4)
    # LatentVariable parameters
    eye = jnp.eye(latent_dim, dtype=jnp.float32)
    prior_mu = jnp.full((num_annotators, latent_dim), z_prior_mu, jnp.float32)
    prior_covtril = jnp.tile(eye * z_prior_sigma, (num_annotators, 1, 1))
    posterior_mu = (jax.random.normal(k1, (num_annotators, latent_dim), jnp.float32)
                    * z_posterior_init_sigma + z_prior_mu)
    posterior_covtril = jnp.tile(eye * z_prior_sigma, (num_annotators, 1, 1))

    # PiononoHead parameters (1x1 convs, xavier init, zero bias), (out, in) layout.
    F, L, C = num_filters, latent_dim, num_classes
    w1 = _xavier(k2, F, F + L)                 # Conv2d(F+L -> F, k=1)
    w1f = w1[:, :F].astype(head_dtype)
    w1z = w1[:, F:]                            # stays f32 (folded into per-batch bias)
    b1 = jnp.zeros((F,), jnp.float32)
    w2 = _xavier(k3, F, F).astype(head_dtype)  # Conv2d(F -> F, k=1)
    b2 = jnp.zeros((F,), jnp.float32)
    w3 = _xavier(k4, C, F).astype(head_dtype)  # last Conv2d(F -> C, k=1)
    b3 = jnp.zeros((C,), jnp.float32)
    return dict(
        prior_mu=prior_mu, prior_covtril=prior_covtril,
        posterior_mu=posterior_mu, posterior_covtril=posterior_covtril,
        head=dict(w1f=w1f, w1z=w1z, b1=b1, w2=w2, b2=b2, w3=w3, b3=b3),
    )


# ----------------------------------------------------------------------------
# LatentVariable.forward (tiny: plain JAX glue)
# ----------------------------------------------------------------------------
def latent_variable_forward(params, annotator_ids, eps, sample=True):
    """z[i] = posterior_mu[a] + tril(posterior_covtril[a]) @ eps[i]  (rsample)."""
    mu = params["posterior_mu"][annotator_ids]                       # (B, L)
    if not sample:
        return mu
    tril = jnp.tril(params["posterior_covtril"])[annotator_ids]      # (B, L, L)
    return mu + jnp.einsum("bij,bj->bi", tril, eps)


# ----------------------------------------------------------------------------
# PiononoModel.sample (forward path)
# ----------------------------------------------------------------------------
def pionono_sample(params, unet_features_nchw, annotator_ids, eps,
                   *, use_z_mean=False, use_softmax=True, tile_hw=None):
    """unet_features_nchw: (B, 16, H, W) -> predictions (B, num_classes, H, W)."""
    head = params["head"]
    z = latent_variable_forward(params, annotator_ids, eps,
                                sample=not use_z_mean)               # (B, L)
    # Fold the spatially-constant latent into a per-batch bias: removes the
    # (N, L) z broadcast and one matmul from the memory-bound kernel.
    b1_eff = z @ head["w1z"].T + head["b1"][None, :]                 # (B, F) f32
    return pionono_head_forward(unet_features_nchw, b1_eff,
                                head["w1f"], head["w2"], head["b2"],
                                head["w3"], head["b3"],
                                use_softmax=use_softmax, tile_hw=tile_hw)


# ----------------------------------------------------------------------------
# Pure-JAX reference mirroring the kernel math (bf16 MXU operands, f32 accum)
# ----------------------------------------------------------------------------
def _pionono_ref(params, unet_features_nchw, annotator_ids, eps,
                 *, use_z_mean=False, use_softmax=True):
    head = params["head"]
    B, F, H, W = unet_features_nchw.shape
    z = latent_variable_forward(params, annotator_ids, eps, sample=not use_z_mean)
    b1_eff = z @ head["w1z"].T + head["b1"][None, :]
    x = unet_features_nchw.astype(jnp.bfloat16).astype(jnp.float32).reshape(B, F, H * W)
    w1f = head["w1f"].astype(jnp.float32)
    w2 = head["w2"].astype(jnp.float32)
    w3 = head["w3"].astype(jnp.float32)
    h = jnp.einsum("oi,bip->bop", w1f, x) + b1_eff[:, :, None]
    h = jnp.maximum(h, 0.0).astype(jnp.bfloat16).astype(jnp.float32)
    h = jnp.einsum("oi,bip->bop", w2, h) + head["b2"][None, :, None]
    h = jnp.maximum(h, 0.0).astype(jnp.bfloat16).astype(jnp.float32)
    y = jnp.einsum("oi,bip->bop", w3, h) + head["b3"][None, :, None]
    if use_softmax:
        y = jax.nn.softmax(y, axis=1)
    return y.reshape(B, w3.shape[0], H, W)


if __name__ == "__main__":
    # Small shapes consistent with the module (num_filters_last_layer=16).
    B, H, W = 2, 16, 16
    num_filters = 16
    latent_dim = 8
    num_classes = 4
    num_annotators = 6

    key = jax.random.PRNGKey(0)
    k_param, k_feat, k_ann, k_eps = jax.random.split(key, 4)

    params = init_pionono_params(
        k_param,
        num_annotators=num_annotators, latent_dim=latent_dim,
        num_filters=num_filters, num_classes=num_classes,
        z_prior_mu=0.0, z_prior_sigma=2.0, z_posterior_init_sigma=8.0)

    # Stand-in for UnetHeadless output (backbone not provided in reference).
    # Passed f32 straight into the kernel (cast to bf16 happens in-kernel); if
    # the real backbone emits bf16 the kernel accepts it directly as well.
    unet_features = jax.random.normal(k_feat, (B, num_filters, H, W), jnp.float32)
    annotator_ids = jax.random.randint(k_ann, (B,), 0, num_annotators)
    eps = jax.random.normal(k_eps, (B, latent_dim), jnp.float32)

    pred = pionono_sample(params, unet_features, annotator_ids, eps,
                          use_z_mean=False, use_softmax=True)
    pred = jax.block_until_ready(pred)

    # Correctness check against a pure-JAX reference of the same math.
    ref = jax.block_until_ready(
        _pionono_ref(params, unet_features, annotator_ids, eps,
                     use_z_mean=False, use_softmax=True))

    assert pred.shape == (B, num_classes, H, W)
    pred_f32 = np.asarray(pred.astype(jnp.float32))
    np.testing.assert_allclose(pred_f32, np.asarray(ref), rtol=1e-2, atol=2e-2)
    # softmax over the class axis sums to ~1 (bf16 output storage)
    np.testing.assert_allclose(pred_f32.sum(axis=1), 1.0, rtol=0, atol=2e-2)

    print("KERNEL_OK")
</pallas_src>

<mosaic_0001>
module attributes {stable_mosaic.version = 11 : i64} {
  func.func @pionono_head_kernel(%arg0: i32, %arg1: i32, %arg2: memref<1x16x256xf32, #tpu.memory_space<vmem>>, %arg3: memref<2x16x1xf32, #tpu.memory_space<vmem>>, %arg4: memref<16x16xbf16, #tpu.memory_space<vmem>>, %arg5: memref<16x16xbf16, #tpu.memory_space<vmem>>, %arg6: memref<16x1xf32, #tpu.memory_space<vmem>>, %arg7: memref<4x16xbf16, #tpu.memory_space<vmem>>, %arg8: memref<4x1xf32, #tpu.memory_space<vmem>>, %arg9: memref<1x4x256xbf16, #tpu.memory_space<vmem>>) attributes {dimension_semantics = [#tpu.dimension_semantics<parallel>, #tpu.dimension_semantics<parallel>], iteration_bounds = array<i64: 2, 1>, scalar_prefetch = 0 : i64, scratch_operands = 0 : i64, tpu.core_type = #tpu.core_type<tc>, window_params = [{transform_indices = @transform_0, window_bounds = array<i64: 1, 16, 256>}, {pipeline_mode = #tpu.pipeline_mode<synchronous>, transform_indices = @transform_1, window_bounds = array<i64: 2, 16, 1>}, {pipeline_mode = #tpu.pipeline_mode<synchronous>, transform_indices = @transform_2, window_bounds = array<i64: 16, 16>}, {pipeline_mode = #tpu.pipeline_mode<synchronous>, transform_indices = @transform_3, window_bounds = array<i64: 16, 16>}, {pipeline_mode = #tpu.pipeline_mode<synchronous>, transform_indices = @transform_4, window_bounds = array<i64: 16, 1>}, {pipeline_mode = #tpu.pipeline_mode<synchronous>, transform_indices = @transform_5, window_bounds = array<i64: 4, 16>}, {pipeline_mode = #tpu.pipeline_mode<synchronous>, transform_indices = @transform_6, window_bounds = array<i64: 4, 1>}, {transform_indices = @transform_7, window_bounds = array<i64: 1, 4, 256>}]} {
    %c0 = arith.constant 0 : index
    %c0_0 = arith.constant 0 : index
    %c0_1 = arith.constant 0 : index
    %0 = vector.load %arg2[%c0, %c0_0, %c0_1] : memref<1x16x256xf32, #tpu.memory_space<vmem>>, vector<1x16x256xf32>
    %1 = vector.shape_cast %0 : vector<1x16x256xf32> to vector<16x256xf32>
    %2 = arith.truncf %1 : vector<16x256xf32> to vector<16x256xbf16>
    %3 = arith.index_cast %arg0 : i32 to index
    %c0_2 = arith.constant 0 : index
    %c0_3 = arith.constant 0 : index
    %4 = vector.load %arg3[%3, %c0_2, %c0_3] : memref<2x16x1xf32, #tpu.memory_space<vmem>>, vector<1x16x1xf32>
    %5 = vector.shape_cast %4 : vector<1x16x1xf32> to vector<16x1xf32>
    %c0_4 = arith.constant 0 : index
    %c0_5 = arith.constant 0 : index
    %6 = vector.load %arg4[%c0_4, %c0_5] : memref<16x16xbf16, #tpu.memory_space<vmem>>, vector<16x16xbf16>
    %cst = arith.constant dense<0.000000e+00> : vector<16x256xf32>
    %7 = tpu.matmul %6, %2, %cst {dimension_numbers = #tpu.dot_dimension_numbers<[1], [0], [0], [1], [0, 0, 1, 1], [], []>} : vector<16x16xbf16>, vector<16x256xbf16>, vector<16x256xf32> -> vector<16x256xf32>
    %8 = vector.broadcast %5 : vector<16x1xf32> to vector<16x256xf32>
    %9 = arith.addf %7, %8 : vector<16x256xf32>
    %cst_6 = arith.constant 0.000000e+00 : f32
    %10 = vector.broadcast %cst_6 : f32 to vector<16x256xf32>
    %11 = arith.maximumf %9, %10 : vector<16x256xf32>
    %c0_7 = arith.constant 0 : index
    %c0_8 = arith.constant 0 : index
    %12 = vector.load %arg5[%c0_7, %c0_8] : memref<16x16xbf16, #tpu.memory_space<vmem>>, vector<16x16xbf16>
    %13 = arith.truncf %11 : vector<16x256xf32> to vector<16x256xbf16>
    %cst_9 = arith.constant dense<0.000000e+00> : vector<16x256xf32>
    %14 = tpu.matmul %12, %13, %cst_9 {dimension_numbers = #tpu.dot_dimension_numbers<[1], [0], [0], [1], [0, 0, 1, 1], [], []>} : vector<16x16xbf16>, vector<16x256xbf16>, vector<16x256xf32> -> vector<16x256xf32>
    %c0_10 = arith.constant 0 : index
    %c0_11 = arith.constant 0 : index
    %15 = vector.load %arg6[%c0_10, %c0_11] : memref<16x1xf32, #tpu.memory_space<vmem>>, vector<16x1xf32>
    %16 = vector.broadcast %15 : vector<16x1xf32> to vector<16x256xf32>
    %17 = arith.addf %14, %16 : vector<16x256xf32>
    %cst_12 = arith.constant 0.000000e+00 : f32
    %18 = vector.broadcast %cst_12 : f32 to vector<16x256xf32>
    %19 = arith.maximumf %17, %18 : vector<16x256xf32>
    %c0_13 = arith.constant 0 : index
    %c0_14 = arith.constant 0 : index
    %20 = vector.load %arg7[%c0_13, %c0_14] : memref<4x16xbf16, #tpu.memory_space<vmem>>, vector<4x16xbf16>
    %21 = arith.truncf %19 : vector<16x256xf32> to vector<16x256xbf16>
    %cst_15 = arith.constant dense<0.000000e+00> : vector<4x256xf32>
    %22 = tpu.matmul %20, %21, %cst_15 {dimension_numbers = #tpu.dot_dimension_numbers<[1], [0], [0], [1], [0, 0, 1, 1], [], []>} : vector<4x16xbf16>, vector<16x256xbf16>, vector<4x256xf32> -> vector<4x256xf32>
    %c0_16 = arith.constant 0 : index
    %c0_17 = arith.constant 0 : index
    %23 = vector.load %arg8[%c0_16, %c0_17] : memref<4x1xf32, #tpu.memory_space<vmem>>, vector<4x1xf32>
    %24 = vector.broadcast %23 : vector<4x1xf32> to vector<4x256xf32>
    %25 = arith.addf %22, %24 : vector<4x256xf32>
    %cst_18 = arith.constant dense<0xFF800000> : vector<256xf32>
    %26 = vector.multi_reduction <maximumf>, %25, %cst_18 [0] : vector<4x256xf32> to vector<256xf32>
    %27 = vector.shape_cast %26 : vector<256xf32> to vector<1x256xf32>
    %28 = vector.broadcast %27 : vector<1x256xf32> to vector<4x256xf32>
    %29 = arith.subf %25, %28 : vector<4x256xf32>
    %30 = math.exp %29 : vector<4x256xf32>
    %cst_19 = arith.constant dense<0.000000e+00> : vector<256xf32>
    %31 = vector.multi_reduction <add>, %30, %cst_19 [0] : vector<4x256xf32> to vector<256xf32>
    %32 = vector.shape_cast %31 : vector<256xf32> to vector<1x256xf32>
    %33 = vector.broadcast %32 : vector<1x256xf32> to vector<4x256xf32>
    %34 = arith.divf %30, %33 : vector<4x256xf32>
    %35 = arith.truncf %34 : vector<4x256xf32> to vector<4x256xbf16>
    %c0_20 = arith.constant 0 : index
    %c0_21 = arith.constant 0 : index
    %c0_22 = arith.constant 0 : index
    %36 = vector.load %arg9[%c0_20, %c0_21, %c0_22] : memref<1x4x256xbf16, #tpu.memory_space<vmem>>, vector<1x4x256xbf16>
    %37 = vector.shape_cast %36 : vector<1x4x256xbf16> to vector<4x256xbf16>
    %38 = vector.shape_cast %35 : vector<4x256xbf16> to vector<1x4x256xbf16>
    tpu.vector_store %arg9[%c0_20, %c0_21, %c0_22], %38 {strides = array<i32>} : memref<1x4x256xbf16, #tpu.memory_space<vmem>>, vector<1x4x256xbf16>,
    return
  }
  func.func @transform_0(%arg0: i32, %arg1: i32) -> (i32, i32, i32) {
    %c0_i32 = arith.constant 0 : i32
    %c0_i32_0 = arith.constant 0 : i32
    return %arg0, %c0_i32, %arg1 : i32, i32, i32
  }
  func.func @transform_1(%arg0: i32, %arg1: i32) -> (i32, i32, i32) {
    %c0_i32 = arith.constant 0 : i32
    %c0_i32_0 = arith.constant 0 : i32
    %c0_i32_1 = arith.constant 0 : i32
    %c0_i32_2 = arith.constant 0 : i32
    return %c0_i32, %c0_i32_0, %c0_i32_1 : i32, i32, i32
  }
  func.func @transform_2(%arg0: i32, %arg1: i32) -> (i32, i32) {
    %c0_i32 = arith.constant 0 : i32
    %c0_i32_0 = arith.constant 0 : i32
    %c0_i32_1 = arith.constant 0 : i32
    return %c0_i32, %c0_i32_0 : i32, i32
  }
  func.func @transform_3(%arg0: i32, %arg1: i32) -> (i32, i32) {
    %c0_i32 = arith.constant 0 : i32
    %c0_i32_0 = arith.constant 0 : i32
    %c0_i32_1 = arith.constant 0 : i32
    return %c0_i32, %c0_i32_0 : i32, i32
  }
  func.func @transform_4(%arg0: i32, %arg1: i32) -> (i32, i32) {
    %c0_i32 = arith.constant 0 : i32
    %c0_i32_0 = arith.constant 0 : i32
    %c0_i32_1 = arith.constant 0 : i32
    return %c0_i32, %c0_i32_0 : i32, i32
  }
  func.func @transform_5(%arg0: i32, %arg1: i32) -> (i32, i32) {
    %c0_i32 = arith.constant 0 : i32
    %c0_i32_0 = arith.constant 0 : i32
    %c0_i32_1 = arith.constant 0 : i32
    return %c0_i32, %c0_i32_0 : i32, i32
  }
  func.func @transform_6(%arg0: i32, %arg1: i32) -> (i32, i32) {
    %c0_i32 = arith.constant 0 : i32
    %c0_i32_0 = arith.constant 0 : i32
    %c0_i32_1 = arith.constant 0 : i32
    return %c0_i32, %c0_i32_0 : i32, i32
  }
  func.func @transform_7(%arg0: i32, %arg1: i32) -> (i32, i32, i32) {
    %c0_i32 = arith.constant 0 : i32
    %c0_i32_0 = arith.constant 0 : i32
    return %arg0, %c0_i32, %arg1 : i32, i32, i32
  }
}

</mosaic_0001>

<llo_original>
// kernel: tpu_custom_call.1
$region0: #{tpu_custom_call.1}
  #allocation0 [shape = 'u32[]', space=smem, size = 0x4, offset = 0x4, fixed_abs, tag = 'smem constant byte address 0x4 - core index']
  #allocation1 [shape = 'u32[72,128]{1,0:T(1,128)}', space=vmem, size = 0x9000, scoped, tag = 'internal scratch']
  %s0 = inlined_call_operand.hbm [shape: f32[2,16,256], index: 0, kind: input, shape index: {}]
  %s1 = inlined_call_operand.vmem [shape: f32[2,16,1], index: 1, kind: input, shape index: {}]
  %s2 = inlined_call_operand.vmem [shape: bf16[16,16], index: 2, kind: input, shape index: {}]
  %s3 = inlined_call_operand.vmem [shape: bf16[16,16], index: 3, kind: input, shape index: {}]
  %s4 = inlined_call_operand.vmem [shape: f32[16,1], index: 4, kind: input, shape index: {}]
  %s5 = inlined_call_operand.vmem [shape: bf16[4,16], index: 5, kind: input, shape index: {}]
  %s6 = inlined_call_operand.vmem [shape: f32[4,1], index: 6, kind: input, shape index: {}]
  %s7 = inlined_call_operand.hbm [shape: bf16[2,4,256], index: 7, kind: output, shape index: {}]
  %s8 = sld [smem:[#allocation0]]
  $region65: #{tpu_custom_call.1} parent=0
    _
  %s10 = ssub.s32 1, %s8
  %s11 = scalar_select 0, %s10, %s8
  $region1: #{tpu_custom_call.1} parent=0
    #allocation2 [shape = 'u8[32768]{0}', space=vmem, size = 0x8000, scoped, tag = 'input window, operand 0']
    #allocation3 [shape = 's32[2]{0}', space=sflag, size = 0x8, scoped, tag = 'scoped memory for tpu_custom_call.1']
    #allocation4 [shape = 's32[2]{0}', space=sflag, size = 0x8, scoped, tag = 'scoped memory for tpu_custom_call.1']
    #allocation5 [shape = 'u8[4096]{0}', space=vmem, size = 0x1000, scoped, tag = 'output window, operand 0']
    %12 = vsyncpa [#allocation3], 0
    %s13 = scalar_lea.sflag [#allocation3], 1
    %14 = vsyncpa %s13, 0
    %15 = vsyncpa [#allocation4], 0
    %s16 = scalar_lea.sflag [#allocation4], 1
    %17 = vsyncpa %s16, 0
    loop: start=0, step=1, limit=4
    $region2: #{tpu_custom_call.1} parent=1 // loop_pre_header
      _
    $region3: #{tpu_custom_call.1} parent=1 // loop_header
      %s19 = sphi 0, %s23
      %p20 = scmp.ge.s32.totalorder %s19, 4
      %s26 = sphi 0, %s38
      %s27 = sphi 0, %s34
      %s28 = sphi 0, %s26
      %s29 = sphi 0, %s27
      %s30 = sphi 0, %s28
      %s31 = sphi 0, %s29
      %s43 = sphi 0, %s45
      %s46 = sphi 0, %s43
      %s47 = sphi 0, %s46
      %s63 = sphi 0, %s47
      %s67 = sphi 0, %s67
      %s69 = sphi 0, %s67
      %s70 = sphi 0, %s69
      %s84 = sphi 0, %s70
      %s88 = sphi 0, %s88
      %s90 = sphi 0, %s88
      %s91 = sphi 0, %s90
      %s105 = sphi 0, %s91
      %s109 = sphi 0, %s109
      %s111 = sphi 0, %s109
      %s112 = sphi 0, %s111
      %s126 = sphi 0, %s112
      %s130 = sphi 0, %s130
      %s132 = sphi 0, %s130
      %s133 = sphi 0, %s132
      %s147 = sphi 0, %s133
      %s151 = sphi 0, %s151
      %s153 = sphi 0, %s151
      %s154 = sphi 0, %s153
      %s168 = sphi 0, %s154
      %s172 = sphi 0, %s172
      %s174 = sphi 0, %s172
      %s175 = sphi 0, %s174
      %s189 = sphi 0, %s175
      %s197 = sphi 0, %s199
      %s200 = sphi 0, %s197
      %s201 = sphi 0, %s200
      %s217 = sphi 0, %s201
    $region4: #{tpu_custom_call.1} parent=1 // loop_header_branch
      %22 = sbr.rel (%p20) target = $region8
    $region5: #{tpu_custom_call.1} parent=1 // loop_body
      %s24 = ssub.s32 %s19, 1
      %s25 = ssub.s32 %s19, 2
      %s32 = sadd.s32 1, %s27
      %p33 = scmp.ge.s32.totalorder %s32, 1
      %s34 = scalar_select %p33, 0, %s32
      %s35 = sadd.s32 1, %s26
      %s36 = scalar_select %p33, %s35, %s26
      %p37 = scmp.ge.s32.totalorder %s36, 2
      %s38 = scalar_select %p37, 0, %s36
      %s39 = ssub.s32 %s26, %s38
      %s40 = ssub.s32 %s27, %s34
      %s41 = sor.u32 %s39, %s40
      %p42 = scmp.eq.s32.totalorder %s41, 0
      %s44 = sadd.s32 %s43, 1
      %s45 = scalar_select %p42, %s43, %s44
      %p48 = pneg %p42
      %p49 = scmp.eq.s32.totalorder %s19, 1
      %p50 = por %p48, %p49
      %p51 = scmp.ne.s32.totalorder %s43, %s46
      %p52 = scmp.eq.s32.totalorder %s19, 0
      %p53 = por %p51, %p52
      %p54 = scmp.ne.s32.totalorder %s43, %s46
      %p55 = scmp.eq.s32.totalorder %s24, 1
      %p56 = por %p54, %p55
      %p57 = scmp.ne.s32.totalorder %s46, %s47
      %p58 = scmp.eq.s32.totalorder %s24, 0
      %p59 = por %p57, %p58
      %p60 = scmp.ne.s32.totalorder %s46, %s47
      %p61 = scmp.eq.s32.totalorder %s25, 1
      %p62 = por %p60, %p61
      %p64 = scmp.ne.s32.totalorder %s47, %s63
      %p65 = scmp.eq.s32.totalorder %s25, 0
      %p66 = por %p64, %p65
      %s68 = sadd.s32 %s67, 1
      %p71 = scmp.eq.s32.totalorder %s19, 1
      %p72 = scmp.ne.s32.totalorder %s67, %s69
      %p73 = scmp.eq.s32.totalorder %s19, 0
      %p74 = por %p72, %p73
      %p75 = scmp.ne.s32.totalorder %s67, %s69
      %p76 = scmp.eq.s32.totalorder %s24, 1
      %p77 = por %p75, %p76
      %p78 = scmp.ne.s32.totalorder %s69, %s70
      %p79 = scmp.eq.s32.totalorder %s24, 0
      %p80 = por %p78, %p79
      %p81 = scmp.ne.s32.totalorder %s69, %s70
      %p82 = scmp.eq.s32.totalorder %s25, 1
      %p83 = por %p81, %p82
      %p85 = scmp.ne.s32.totalorder %s70, %s84
      %p86 = scmp.eq.s32.totalorder %s25, 0
      %p87 = por %p85, %p86
      %s89 = sadd.s32 %s88, 1
      %p92 = scmp.eq.s32.totalorder %s19, 1
      %p93 = scmp.ne.s32.totalorder %s88, %s90
      %p94 = scmp.eq.s32.totalorder %s19, 0
      %p95 = por %p93, %p94
      %p96 = scmp.ne.s32.totalorder %s88, %s90
      %p97 = scmp.eq.s32.totalorder %s24, 1
      %p98 = por %p96, %p97
      %p99 = scmp.ne.s32.totalorder %s90, %s91
      %p100 = scmp.eq.s32.totalorder %s24, 0
      %p101 = por %p99, %p100
      %p102 = scmp.ne.s32.totalorder %s90, %s91
      %p103 = scmp.eq.s32.totalorder %s25, 1
      %p104 = por %p102, %p103
      %p106 = scmp.ne.s32.totalorder %s91, %s105
      %p107 = scmp.eq.s32.totalorder %s25, 0
      %p108 = por %p106, %p107
      %s110 = sadd.s32 %s109, 1
      %p113 = scmp.eq.s32.totalorder %s19, 1
      %p114 = scmp.ne.s32.totalorder %s109, %s111
      %p115 = scmp.eq.s32.totalorder %s19, 0
      %p116 = por %p114, %p115
      %p117 = scmp.ne.s32.totalorder %s109, %s111
      %p118 = scmp.eq.s32.totalorder %s24, 1
      %p119 = por %p117, %p118
      %p120 = scmp.ne.s32.totalorder %s111, %s112
      %p121 = scmp.eq.s32.totalorder %s24, 0
      %p122 = por %p120, %p121
      %p123 = scmp.ne.s32.totalorder %s111, %s112
      %p124 = scmp.eq.s32.totalorder %s25, 1
      %p125 = por %p123, %p124
      %p127 = scmp.ne.s32.totalorder %s112, %s126
      %p128 = scmp.eq.s32.totalorder %s25, 0
      %p129 = por %p127, %p128
      %s131 = sadd.s32 %s130, 1
      %p134 = scmp.eq.s32.totalorder %s19, 1
      %p135 = scmp.ne.s32.totalorder %s130, %s132
      %p136 = scmp.eq.s32.totalorder %s19, 0
      %p137 = por %p135, %p136
      %p138 = scmp.ne.s32.totalorder %s130, %s132
      %p139 = scmp.eq.s32.totalorder %s24, 1
      %p140 = por %p138, %p139
      %p141 = scmp.ne.s32.totalorder %s132, %s133
      %p142 = scmp.eq.s32.totalorder %s24, 0
      %p143 = por %p141, %p142
      %p144 = scmp.ne.s32.totalorder %s132, %s133
      %p145 = scmp.eq.s32.totalorder %s25, 1
      %p146 = por %p144, %p145
      %p148 = scmp.ne.s32.totalorder %s133, %s147
      %p149 = scmp.eq.s32.totalorder %s25, 0
      %p150 = por %p148, %p149
      %s152 = sadd.s32 %s151, 1
      %p155 = scmp.eq.s32.totalorder %s19, 1
      %p156 = scmp.ne.s32.totalorder %s151, %s153
      %p157 = scmp.eq.s32.totalorder %s19, 0
      %p158 = por %p156, %p157
      %p159 = scmp.ne.s32.totalorder %s151, %s153
      %p160 = scmp.eq.s32.totalorder %s24, 1
      %p161 = por %p159, %p160
      %p162 = scmp.ne.s32.totalorder %s153, %s154
      %p163 = scmp.eq.s32.totalorder %s24, 0
      %p164 = por %p162, %p163
      %p165 = scmp.ne.s32.totalorder %s153, %s154
      %p166 = scmp.eq.s32.totalorder %s25, 1
      %p167 = por %p165, %p166
      %p169 = scmp.ne.s32.totalorder %s154, %s168
      %p170 = scmp.eq.s32.totalorder %s25, 0
      %p171 = por %p169, %p170
      %s173 = sadd.s32 %s172, 1
      %p176 = scmp.eq.s32.totalorder %s19, 1
      %p177 = scmp.ne.s32.totalorder %s172, %s174
      %p178 = scmp.eq.s32.totalorder %s19, 0
      %p179 = por %p177, %p178
      %p180 = scmp.ne.s32.totalorder %s172, %s174
      %p181 = scmp.eq.s32.totalorder %s24, 1
      %p182 = por %p180, %p181
      %p183 = scmp.ne.s32.totalorder %s174, %s175
      %p184 = scmp.eq.s32.totalorder %s24, 0
      %p185 = por %p183, %p184
      %p186 = scmp.ne.s32.totalorder %s174, %s175
      %p187 = scmp.eq.s32.totalorder %s25, 1
      %p188 = por %p186, %p187
      %p190 = scmp.ne.s32.totalorder %s175, %s189
      %p191 = scmp.eq.s32.totalorder %s25, 0
      %p192 = por %p190, %p191
      %s193 = ssub.s32 %s26, %s38
      %s194 = ssub.s32 %s27, %s34
      %s195 = sor.u32 %s193, %s194
      %p196 = scmp.eq.s32.totalorder %s195, 0
      %s198 = sadd.s32 %s197, 1
      %s199 = scalar_select %p196, %s197, %s198
      %p202 = pneg %p196
      %p203 = scmp.eq.s32.totalorder %s19, 1
      %p204 = por %p202, %p203
      %p205 = scmp.ne.s32.totalorder %s197, %s200
      %p206 = scmp.eq.s32.totalorder %s19, 0
      %p207 = por %p205, %p206
      %p208 = scmp.ne.s32.totalorder %s197, %s200
      %p209 = scmp.eq.s32.totalorder %s24, 1
      %p210 = por %p208, %p209
      %p211 = scmp.ne.s32.totalorder %s200, %s201
      %p212 = scmp.eq.s32.totalorder %s24, 0
      %p213 = por %p211, %p212
      %p214 = scmp.ne.s32.totalorder %s200, %s201
      %p215 = scmp.eq.s32.totalorder %s25, 1
      %p216 = por %p214, %p215
      %p218 = scmp.ne.s32.totalorder %s201, %s217
      %p219 = scmp.eq.s32.totalorder %s25, 0
      %p220 = por %p218, %p219
      %p221 = scmp.le.s32.totalorder 1, %s19
      %p222 = scmp.lt.s32.totalorder %s19, 3
      %p223 = pnand %p221, %p222
      %p224 = pneg %p223
      // Predicated region
      $region9: #{tpu_custom_call.1} parent=5 // pred_check
        _
      $region10: #{tpu_custom_call.1} parent=5 // pred_check_branch
        %226 = sbr.rel (%p223) target = $region12
      $region11: #{tpu_custom_call.1} parent=5 // pred_region
        %s227 = ssub.s32 %s19, 1
        // Predicated region
        $region13: #{tpu_custom_call.1} parent=11 // pred_check
          %p228 = pneg %p80
        $region14: #{tpu_custom_call.1} parent=11 // pred_check_branch
          %230 = sbr.rel (%p228) target = $region16
        $region15: #{tpu_custom_call.1} parent=11 // pred_region
          _
        $region16: #{tpu_custom_call.1} parent=11 // pred_fallthru
          _
        // Predicated region
        $region17: #{tpu_custom_call.1} parent=11 // pred_check
          %p231 = pneg %p101
        $region18: #{tpu_custom_call.1} parent=11 // pred_check_branch
          %233 = sbr.rel (%p231) target = $region20
        $region19: #{tpu_custom_call.1} parent=11 // pred_region
          _
        $region20: #{tpu_custom_call.1} parent=11 // pred_fallthru
          _
        // Predicated region
        $region21: #{tpu_custom_call.1} parent=11 // pred_check
          %p234 = pneg %p122
        $region22: #{tpu_custom_call.1} parent=11 // pred_check_branch
          %236 = sbr.rel (%p234) target = $region24
        $region23: #{tpu_custom_call.1} parent=11 // pred_region
          _
        $region24: #{tpu_custom_call.1} parent=11 // pred_fallthru
          _
        // Predicated region
        $region25: #{tpu_custom_call.1} parent=11 // pred_check
          %p237 = pneg %p143
        $region26: #{tpu_custom_call.1} parent=11 // pred_check_branch
          %239 = sbr.rel (%p237) target = $region28
        $region27: #{tpu_custom_call.1} parent=11 // pred_region
          _
        $region28: #{tpu_custom_call.1} parent=11 // pred_fallthru
          _
        // Predicated region
        $region29: #{tpu_custom_call.1} parent=11 // pred_check
          %p240 = pneg %p164
        $region30: #{tpu_custom_call.1} parent=11 // pred_check_branch
          %242 = sbr.rel (%p240) target = $region32
        $region31: #{tpu_custom_call.1} parent=11 // pred_region
          _
        $region32: #{tpu_custom_call.1} parent=11 // pred_fallthru
          _
        // Predicated region
        $region33: #{tpu_custom_call.1} parent=11 // pred_check
          %p243 = pneg %p185
        $region34: #{tpu_custom_call.1} parent=11 // pred_check_branch
          %245 = sbr.rel (%p243) target = $region36
        $region35: #{tpu_custom_call.1} parent=11 // pred_region
          _
        $region36: #{tpu_custom_call.1} parent=11 // pred_fallthru
          _
      $region12: #{tpu_custom_call.1} parent=5 // pred_fallthru
        _
      %p246 = scmp.lt.s32.totalorder %s19, 2
      // Predicated region
      $region37: #{tpu_custom_call.1} parent=5 // pred_check
        %p247 = pneg %p246
      $region38: #{tpu_custom_call.1} parent=5 // pred_check_branch
        %249 = sbr.rel (%p247) target = $region40
      $region39: #{tpu_custom_call.1} parent=5 // pred_region
        // Predicated region
        $region41: #{tpu_custom_call.1} parent=39 // pred_check
          %p250 = pneg %p53
        $region42: #{tpu_custom_call.1} parent=39 // pred_check_branch
          %252 = sbr.rel (%p250) target = $region44
        $region43: #{tpu_custom_call.1} parent=39 // pred_region
          %s253 = sand.u32 %s43, 1
          %s254 = scalar_lea.sflag [#allocation3], %s253
          %s255 = sand.u32 %s43, 1
          %s256 = smul.addr %s255, 32
          %s257 = scalar_lea.vmem [#allocation2], %s256
          %s258 = smul.u32 2, %s27
          %260 = vsyncadd %s254, 0
          %s261 = smul.addr %s26, 4
          %s262 = sadd.s32 %s258, %s261
          %s263 = smul.addr %s262, 8
          %s264 = scalar_lea.hbm %s0, %s263
          %s265 = sshll.u32 %s264, 4
          %s266 = int_to_ptr.hbm [resolvable:$true] %s265
          %s267 = sshll.u32 %s257, 4
          %s268 = int_to_ptr.vmem [resolvable:$true] %s267
          %273 = dma.hbm_to_vmem [thread:$0]  %s266, 512, %s268, %s254, 256, 256, 16
        $region44: #{tpu_custom_call.1} parent=39 // pred_fallthru
          _
      $region40: #{tpu_custom_call.1} parent=5 // pred_fallthru
        _
      %p274 = scmp.le.s32.totalorder 1, %s19
      %p275 = scmp.lt.s32.totalorder %s19, 3
      %p276 = pnand %p274, %p275
      %p277 = pneg %p276
      // Predicated region
      $region45: #{tpu_custom_call.1} parent=5 // pred_check
        _
      $region46: #{tpu_custom_call.1} parent=5 // pred_check_branch
        %279 = sbr.rel (%p276) target = $region48
      $region47: #{tpu_custom_call.1} parent=5 // pred_region
        %s280 = ssub.s32 %s19, 1
        %s281 = sand.u32 %s46, 1
        %s282 = scalar_lea.sflag [#allocation3], %s281
        %s283 = sand.u32 %s46, 1
        %s284 = smul.addr %s283, 32
        %s285 = scalar_lea.vmem [#allocation2], %s284
        // Predicated region
        $region49: #{tpu_custom_call.1} parent=47 // pred_check
          %p286 = pneg %p59
        $region50: #{tpu_custom_call.1} parent=47 // pred_check_branch
          %288 = sbr.rel (%p286) target = $region52
        $region51: #{tpu_custom_call.1} parent=47 // pred_region
          %290 = dma.done %s282, 512
        $region52: #{tpu_custom_call.1} parent=47 // pred_fallthru
          _
        %s291 = sand.u32 %s46, 1
        %s292 = scalar_lea.sflag [#allocation3], %s291
        %s293 = sand.u32 %s46, 1
        %s294 = smul.addr %s293, 32
        %s295 = scalar_lea.vmem [#allocation2], %s294
        %p296 = pneg %p59
        %p297 = pneg %p56
        %p298 = pneg %p80
        %p299 = pneg %p77
        %p300 = pneg %p101
        %p301 = pneg %p98
        %p302 = pneg %p122
        %p303 = pneg %p119
        %p304 = pneg %p143
        %p305 = pneg %p140
        %p306 = pneg %p164
        %p307 = pneg %p161
        %p308 = pneg %p185
        %p309 = pneg %p182
        %p310 = pneg %p213
        %p311 = pneg %p210
        %s312 = sand.u32 %s200, 1
        %s313 = scalar_lea.sflag [#allocation4], %s312
        %s314 = sand.u32 %s200, 1
        %s315 = smul.addr %s314, 4
        %s316 = scalar_lea.vmem [#allocation5], %s315
        %s317 = smul.u32 2, %s29
        %s318 = smul.u32 2, %s29
        %v320 = vld [vmem:[%s285] sm:$0xff]
        %v321 = vld [vmem:[%s285 + $0x8] sm:$0xff]
        %v322 = vld [vmem:[%s285 + $0x10] sm:$0xff]
        %v323 = vld [vmem:[%s285 + $0x18] sm:$0xff]
        %v324 = vpack.c.bf16 %v322, %v320
        %v325 = vpack.c.bf16 %v323, %v321
        %s326 = smul.u32 %s28, 16
        %s327 = scalar_lea.vmem %s1, %s326
        %v328 = vld [vmem:[%s327] sm:$0xff]
        %v329 = vld [vmem:[%s327 + $0x8] sm:$0xff]
        %v330 = vld [vmem:[%s2] sm:$0xf]
        %v331 = vld [vmem:[%s2 + $0x4] sm:$0xf]
        %333 = vset.pattern.permute.xlu0 0
        %334 = vperm.xlu0 %333, %v328
        %v335 = vpop.permute.xlu0 %334
        %338 = vset.pattern.permute.xlu0 0
        %339 = vperm.xlu0 %338, %v329
        %v340 = vpop.permute.xlu0 %339
        %v344 = vunpack.c.l.b16 %v330
        %v345 = vunpack.c.l.b16 %v331
        %v346 = vpack.c.b16 %v345, %v344
        %vm347 = vcmask 130048
        %v349 = vsel %vm347, %v346, 0
        %351 = vmatpush.bf16.msra.mxu0 0
        %352 = vmatpush.bf16.msra.mxu0 0
        %353 = vmatpush.bf16.msra.mxu0 0
        %354 = vmatpush.bf16.msra.mxu0 0
        %355 = vmatpush.bf16.msra.mxu0 0
        %356 = vmatpush.bf16.msra.mxu0 0
        %357 = vmatpush.bf16.msra.mxu0 0
        %358 = vmatpush.bf16.msra.mxu0 %v324
        %359 = vmatmul.bf16.gmra.mxu0 %v349
        %v360 = vpop.f32.mrf.mxu0
        %v361 = vadd.f32 %v335, %v360
        %v362 = vpop.f32.mrf.mxu0
        %v363 = vadd.f32 %v340, %v362
        %364 = vdwg.mxu0
        %365 = vmatpush.bf16.msra.mxu0 0
        %366 = vmatpush.bf16.msra.mxu0 0
        %367 = vmatpush.bf16.msra.mxu0 0
        %368 = vmatpush.bf16.msra.mxu0 0
        %369 = vmatpush.bf16.msra.mxu0 0
        %370 = vmatpush.bf16.msra.mxu0 0
        %371 = vmatpush.bf16.msra.mxu0 0
        %372 = vmatpush.bf16.msra.mxu0 %v325
        %373 = vmatmul.bf16.gmra.mxu0 %v349
        %v374 = vpop.f32.mrf.mxu0
        %v375 = vadd.f32 %v335, %v374
        %v376 = vpop.f32.mrf.mxu0
        %v377 = vadd.f32 %v340, %v376
        %378 = vdwg.mxu0
        %v379 = vmax.f32 %v361, 0.0
        %v380 = vmax.f32 %v375, 0.0
        %v381 = vmax.f32 %v363, 0.0
        %v382 = vmax.f32 %v377, 0.0
        %v383 = vld [vmem:[%s3] sm:$0xf]
        %v384 = vld [vmem:[%s3 + $0x4] sm:$0xf]
        %v385 = vpack.c.bf16 %v381, %v379
        %v386 = vpack.c.bf16 %v382, %v380
        %v387 = vld [vmem:[%s4] sm:$0xff]
        %v388 = vld [vmem:[%s4 + $0x8] sm:$0xff]
        %390 = vset.pattern.permute.xlu0 0
        %391 = vperm.xlu0 %390, %v387
        %v392 = vpop.permute.xlu0 %391
        %395 = vset.pattern.permute.xlu0 0
        %396 = vperm.xlu0 %395, %v388
        %v397 = vpop.permute.xlu0 %396
        %v401 = vunpack.c.l.b16 %v383
        %v402 = vunpack.c.l.b16 %v384
        %v403 = vpack.c.b16 %v402, %v401
        %v405 = vsel %vm347, %v403, 0
        %407 = vmatpush.bf16.msra.mxu0 0
        %408 = vmatpush.bf16.msra.mxu0 0
        %409 = vmatpush.bf16.msra.mxu0 0
        %410 = vmatpush.bf16.msra.mxu0 0
        %411 = vmatpush.bf16.msra.mxu0 0
        %412 = vmatpush.bf16.msra.mxu0 0
        %413 = vmatpush.bf16.msra.mxu0 0
        %414 = vmatpush.bf16.msra.mxu0 %v385
        %415 = vmatmul.bf16.gmra.mxu0 %v405
        %v416 = vpop.f32.mrf.mxu0
        %v417 = vadd.f32 %v392, %v416
        %v418 = vpop.f32.mrf.mxu0
        %v419 = vadd.f32 %v397, %v418
        %420 = vdwg.mxu0
        %421 = vmatpush.bf16.msra.mxu0 0
        %422 = vmatpush.bf16.msra.mxu0 0
        %423 = vmatpush.bf16.msra.mxu0 0
        %424 = vmatpush.bf16.msra.mxu0 0
        %425 = vmatpush.bf16.msra.mxu0 0
        %426 = vmatpush.bf16.msra.mxu0 0
        %427 = vmatpush.bf16.msra.mxu0 0
        %428 = vmatpush.bf16.msra.mxu0 %v386
        %429 = vmatmul.bf16.gmra.mxu0 %v405
        %v430 = vpop.f32.mrf.mxu0
        %v431 = vadd.f32 %v392, %v430
        %v432 = vpop.f32.mrf.mxu0
        %v433 = vadd.f32 %v397, %v432
        %434 = vdwg.mxu0
        %v435 = vmax.f32 %v417, 0.0
        %v436 = vmax.f32 %v431, 0.0
        %v437 = vmax.f32 %v419, 0.0
        %v438 = vmax.f32 %v433, 0.0
        %v439 = vld [vmem:[%s5] sm:$0x3]
        %v440 = vpack.c.bf16 %v437, %v435
        %v441 = vpack.c.bf16 %v438, %v436
        %v442 = vld [vmem:[%s6] sm:$0xf]
        %444 = vset.pattern.permute.xlu0 0
        %445 = vperm.xlu0 %444, %v442
        %v446 = vpop.permute.xlu0 %445
        %v449 = vsel %vm347, %v439, 0
        %451 = vmatpush.bf16.msra.mxu0 0
        %452 = vmatpush.bf16.msra.mxu0 0
        %453 = vmatpush.bf16.msra.mxu0 0
        %454 = vmatpush.bf16.msra.mxu0 0
        %455 = vmatpush.bf16.msra.mxu0 0
        %456 = vmatpush.bf16.msra.mxu0 0
        %457 = vmatpush.bf16.msra.mxu0 0
        %458 = vmatpush.bf16.msra.mxu0 %v440
        %459 = vmatmul.bf16.gmra.mxu0 %v449
        %v460 = vpop.f32.mrf.mxu0
        %v461 = vadd.f32 %v446, %v460
        %v462 = vpop.f32.mrf.mxu0
        %463 = vdwg.mxu0
        %464 = vmatpush.bf16.msra.mxu0 0
        %465 = vmatpush.bf16.msra.mxu0 0
        %466 = vmatpush.bf16.msra.mxu0 0
        %467 = vmatpush.bf16.msra.mxu0 0
        %468 = vmatpush.bf16.msra.mxu0 0
        %469 = vmatpush.bf16.msra.mxu0 0
        %470 = vmatpush.bf16.msra.mxu0 0
        %471 = vmatpush.bf16.msra.mxu0 %v441
        %472 = vmatmul.bf16.gmra.mxu0 %v449
        %v473 = vpop.f32.mrf.mxu0
        %v474 = vadd.f32 %v446, %v473
        %v475 = vpop.f32.mrf.mxu0
        %476 = vdwg.mxu0
        %vm477 = vcmask 1043456
        %v478 = vsel %vm477, %v461, -inf
        %v479 = vrot.slane %v478, 4
        %v480 = vmax.f32 %v478, %v479
        %v481 = vrot.slane %v480, 2
        %v482 = vmax.f32 %v480, %v481
        %v483 = vrot.slane %v482, 1
        %v484 = vmax.f32 %v482, %v483
        %v485 = vsel %vm477, %v474, -inf
        %v486 = vrot.slane %v485, 4
        %v487 = vmax.f32 %v485, %v486
        %v488 = vrot.slane %v487, 2
        %v489 = vmax.f32 %v487, %v488
        %v490 = vrot.slane %v489, 1
        %v491 = vmax.f32 %v489, %v490
        %v492 = vsub.f32 %v461, %v484
        %v493 = vsub.f32 %v474, %v491
        %v494 = vmul.f32 %v492, 1.442695
        %v495 = vpow.pop %v494
        %v496 = vmul.f32 %v493, 1.442695
        %v497 = vpow.pop %v496
        %v498 = vsel %vm477, %v495, 0.0
        %v499 = vrot.slane %v498, 4
        %v500 = vadd.f32 %v498, %v499
        %v501 = vrot.slane %v500, 2
        %v502 = vadd.f32 %v500, %v501
        %v503 = vrot.slane %v502, 1
        %v504 = vadd.f32 %v502, %v503
        %v505 = vsel %vm477, %v497, 0.0
        %v506 = vrot.slane %v505, 4
        %v507 = vadd.f32 %v505, %v506
        %v508 = vrot.slane %v507, 2
        %v509 = vadd.f32 %v507, %v508
        %v510 = vrot.slane %v509, 1
        %v511 = vadd.f32 %v509, %v510
        %v512 = vrcp.pop %v504
        %v513 = vmul.f32 %v504, %v512
        %v514 = vsub.f32 1.0, %v513
        %v515 = vmul.f32 %v512, %v514
        %v516 = vadd.f32 %v512, %v515
        %vm517 = vweird.f32 %v504
        %vm518 = vweird.f32 %v512
        %vm519 = vmor %vm517, %vm518
        %v520 = vsel %vm519, %v512, %v516
        %v521 = vand.u32 2147483647, %v504
        %vm522 = vcmp.eq.f32.partialorder %v521, 8.507059e+37
        %v523 = vand.u32 %v504, 2147483648
        %v524 = vor.u32 1.1754944e-38, %v523
        %v525 = vsel %vm522, %v524, %v520
        %v526 = vmul.f32 %v495, %v525
        %v527 = vrcp.pop %v511
        %v528 = vmul.f32 %v511, %v527
        %v529 = vsub.f32 1.0, %v528
        %v530 = vmul.f32 %v527, %v529
        %v531 = vadd.f32 %v527, %v530
        %vm532 = vweird.f32 %v511
        %vm533 = vweird.f32 %v527
        %vm534 = vmor %vm532, %vm533
        %v535 = vsel %vm534, %v527, %v531
        %v536 = vand.u32 2147483647, %v511
        %vm537 = vcmp.eq.f32.partialorder %v536, 8.507059e+37
        %v538 = vand.u32 %v511, 2147483648
        %v539 = vor.u32 1.1754944e-38, %v538
        %v540 = vsel %vm537, %v539, %v535
        %v541 = vmul.f32 %v497, %v540
        %v542 = vpack.c.bf16 %v541, %v526
        %v544 = vrot.slane %v542, 2
        %vm545 = vcmask 1041408
        %v548 = vsel %vm545, %v542, %v544
        %550 = vst [vmem:[%s316] sm:$0xf] %v548
        %s551 = sand.u32 %s200, 1
        %s552 = scalar_lea.sflag [#allocation4], %s551
        %s553 = sand.u32 %s200, 1
        %s554 = smul.addr %s553, 4
        %s555 = scalar_lea.vmem [#allocation5], %s554
        // Predicated region
        $region53: #{tpu_custom_call.1} parent=47 // pred_check
          %p556 = pneg %p210
        $region54: #{tpu_custom_call.1} parent=47 // pred_check_branch
          %558 = sbr.rel (%p556) target = $region56
        $region55: #{tpu_custom_call.1} parent=47 // pred_region
          %s559 = smul.u32 2, %s29
          %561 = vsyncadd %s552, 0
          %s562 = smul.addr %s28, 2
          %s563 = sadd.s32 %s559, %s562
          %s564 = smul.addr %s563, 2
          %s565 = scalar_lea.hbm %s7, %s564
          %s567 = sshll.u32 %s555, 4
          %s568 = int_to_ptr.vmem [resolvable:$true] %s567
          %s569 = sshll.u32 %s565, 4
          %s570 = int_to_ptr.hbm [resolvable:$true] %s569
          %572 = dma.vmem_to_hbm [thread:$0]  %s568, 64, %s570, %s552
        $region56: #{tpu_custom_call.1} parent=47 // pred_fallthru
          _
      $region48: #{tpu_custom_call.1} parent=5 // pred_fallthru
        _
      %p573 = scmp.le.s32.totalorder 2, %s19
      // Predicated region
      $region57: #{tpu_custom_call.1} parent=5 // pred_check
        %p574 = pneg %p573
      $region58: #{tpu_custom_call.1} parent=5 // pred_check_branch
        %576 = sbr.rel (%p574) target = $region60
      $region59: #{tpu_custom_call.1} parent=5 // pred_region
        %s577 = ssub.s32 %s19, 2
        // Predicated region
        $region61: #{tpu_custom_call.1} parent=59 // pred_check
          %p578 = pneg %p216
        $region62: #{tpu_custom_call.1} parent=59 // pred_check_branch
          %580 = sbr.rel (%p578) target = $region64
        $region63: #{tpu_custom_call.1} parent=59 // pred_region
          %s581 = sand.u32 %s201, 1
          %s582 = scalar_lea.sflag [#allocation4], %s581
          %s583 = sand.u32 %s201, 1
          %s584 = smul.addr %s583, 4
          %s585 = scalar_lea.vmem [#allocation5], %s584
          %587 = dma.done %s582, 64
        $region64: #{tpu_custom_call.1} parent=59 // pred_fallthru
          _
      $region60: #{tpu_custom_call.1} parent=5 // pred_fallthru
        _
    $region6: #{tpu_custom_call.1} parent=1 // loop_footer
      %s23 = sadd.s32 1, %s19
    $region7: #{tpu_custom_call.1} parent=1 // loop_footer_branch
      %18 = sbr.rel target = $region3
    $region8: #{tpu_custom_call.1} parent=1 // loop_exit
      _
    %588 = vsyncpa [#allocation3], 1
    %s589 = scalar_lea.sflag [#allocation3], 1
    %590 = vsyncpa %s589, 1
    %591 = vsyncpa [#allocation4], 1
    %s592 = scalar_lea.sflag [#allocation4], 1
    %593 = vsyncpa %s592, 1

</llo_original>
